<compile_context>
chip_gen: v5e
topology: v5e:2x2
jax: 0.10.0
libtpu: 0.0.40
codegen_flags: <defaults>
</compile_context>

<pallas_src>
import jax
import jax.numpy as jnp
from jax.experimental import pallas as pl
from jax.experimental.pallas import tpu as pltpu


def _dice_sums_kernel(x_ref, t_ref, out_ref, acc_ref):
    # x_ref/t_ref block: (row_tile, hw_tile)
    # out_ref block:     (row_tile, 3)   [intersection_sum, input_sum, target_sum]
    # acc_ref scratch:   (row_tile, 3) f32, persistent across the HW grid axis.
    h = pl.program_id(1)

    @pl.when(h == 0)
    def _init():
        acc_ref[...] = jnp.zeros_like(acc_ref)

    x = x_ref[...].astype(jnp.float32)
    t = t_ref[...].astype(jnp.float32)

    acc_ref[:, 0:1] += jnp.sum(x * t, axis=-1, keepdims=True)
    acc_ref[:, 1:2] += jnp.sum(x, axis=-1, keepdims=True)
    acc_ref[:, 2:3] += jnp.sum(t, axis=-1, keepdims=True)

    @pl.when(h == pl.num_programs(1) - 1)
    def _finalize():
        out_ref[...] = acc_ref[...]


def _round_up(a, b):
    return -(-a // b) * b


def _choose_tiles(rows, hw):
    # Row tile (sublane axis): use the full dim when small (always legal),
    # otherwise prefer a multiple-of-8 divisor <= 128, else pad to 8s.
    if rows <= 128:
        row_tile, rows_p = rows, rows
    else:
        row_tile = 8
        for cand in range(128, 7, -8):
            if rows % cand == 0:
                row_tile = cand
                break
        rows_p = _round_up(rows, row_tile)

    # HW tile (lane / reduction axis): full dim when small (single step),
    # otherwise a 128-multiple tile, preferring one that divides HW (no pad).
    if hw <= 4096:
        hw_tile, hw_p = hw, hw
    else:
        hw_tile = 2048
        for cand in range(4096, 127, -128):
            if hw % cand == 0:
                hw_tile = cand
                break
        hw_p = _round_up(hw, hw_tile)

    return row_tile, rows_p, hw_tile, hw_p


def multiclass_dice_loss(inp, tgt, weights=None, smooth=0.01):
    """inp, tgt: (N, C, H, W). Returns scalar loss (float32).

    Matches PyTorch MulticlassDiceLoss.forward (per-class DiceLoss with
    smooth=0.01, -log of batch-summed dice / N, averaged over classes).
    """
    N, C, H, W = inp.shape
    rows = N * C
    HW = H * W

    # Free reshapes of the contiguous NCHW layout (no transpose pass over HBM).
    x2 = inp.reshape(rows, HW)
    t2 = tgt.reshape(rows, HW)

    row_tile, rows_p, hw_tile, hw_p = _choose_tiles(rows, HW)

    if rows_p != rows or hw_p != HW:
        # Zero padding is reduction-neutral (adds 0 to all three sums).
        x2 = jnp.pad(x2, ((0, rows_p - rows), (0, hw_p - HW)))
        t2 = jnp.pad(t2, ((0, rows_p - rows), (0, hw_p - HW)))

    grid = (rows_p // row_tile, hw_p // hw_tile)

    sums = pl.pallas_call(
        _dice_sums_kernel,
        out_shape=jax.ShapeDtypeStruct((rows_p, 3), jnp.float32),
        grid_spec=pltpu.PrefetchScalarGridSpec(
            num_scalar_prefetch=0,
            grid=grid,
            in_specs=[
                pl.BlockSpec((row_tile, hw_tile), lambda r, h: (r, h)),
                pl.BlockSpec((row_tile, hw_tile), lambda r, h: (r, h)),
            ],
            out_specs=pl.BlockSpec((row_tile, 3), lambda r, h: (r, 0)),
            scratch_shapes=[pltpu.VMEM((row_tile, 3), jnp.float32)],
        ),
        compiler_params=pltpu.CompilerParams(
            dimension_semantics=("parallel", "arbitrary")),
    )(x2, t2)

    sums = sums[:rows].reshape(N, C, 3)
    inter = sums[:, :, 0]   # (N, C)
    x_sum = sums[:, :, 1]
    t_sum = sums[:, :, 2]

    # Per-sample dice ratio, summed over batch, -log, averaged over classes.
    dice = (2.0 * inter + smooth) / (x_sum + t_sum + smooth)      # (N, C)
    per_class = -jnp.log(jnp.sum(dice, axis=0) / N)               # (C,)
    if weights is not None:
        per_class = per_class * weights.astype(jnp.float32)
    return jnp.sum(per_class) / C


def _reference(inp, tgt, weights=None, smooth=0.01):
    # Pure-JAX reference reproducing the PyTorch module for a sanity check.
    N, C, H, W = inp.shape
    total = 0.0
    for i in range(C):
        xf = inp[:, i, :, :].reshape(N, -1)
        tf = tgt[:, i, :, :].reshape(N, -1)
        inter = (xf * tf).sum(axis=1)
        loss = (2 * inter + smooth) / (xf.sum(axis=1) + tf.sum(axis=1) + smooth)
        loss = -jnp.log(loss.sum() / N)
        if weights is not None:
            loss = loss * weights[i]
        total = total + loss
    return total / C


if __name__ == "__main__":
    key = jax.random.PRNGKey(0)
    k1, k2 = jax.random.split(key)

    N, C, H, W = 2, 4, 16, 16
    # "input" ~ predicted class probabilities, "target" ~ binary masks.
    x = jax.random.uniform(k1, (N, C, H, W), dtype=jnp.float32)
    t = (jax.random.uniform(k2, (N, C, H, W)) > 0.5).astype(jnp.float32)

    loss_fn = jax.jit(multiclass_dice_loss)
    loss = jax.block_until_ready(loss_fn(x, t))

    ref = _reference(x, t)
    assert jnp.allclose(loss, ref, rtol=1e-5, atol=1e-5), (loss, ref)

    print("KERNEL_OK")
</pallas_src>

<mosaic_0001>
module attributes {stable_mosaic.version = 11 : i64} {
  func.func @_dice_sums_kernel(%arg0: i32, %arg1: i32, %arg2: memref<8x256xf32, #tpu.memory_space<vmem>>, %arg3: memref<8x256xf32, #tpu.memory_space<vmem>>, %arg4: memref<8x3xf32, #tpu.memory_space<vmem>>, %arg5: memref<8x3xf32, #tpu.memory_space<vmem>>) attributes {dimension_semantics = [#tpu.dimension_semantics<parallel>, #tpu.dimension_semantics<arbitrary>], iteration_bounds = array<i64: 1, 1>, scalar_prefetch = 0 : i64, scratch_operands = 1 : i64, tpu.core_type = #tpu.core_type<tc>, window_params = [{transform_indices = @transform_0, window_bounds = array<i64: 8, 256>}, {transform_indices = @transform_1, window_bounds = array<i64: 8, 256>}, {transform_indices = @transform_2, window_bounds = array<i64: 8, 3>}]} {
    %c0_i32 = arith.constant 0 : i32
    %0 = arith.cmpi eq, %arg1, %c0_i32 : i32
    %1 = arith.extui %0 : i1 to i32
    %c0_i32_0 = arith.constant 0 : i32
    %2 = arith.cmpi ne, %1, %c0_i32_0 : i32
    scf.if %2 {
      %cst_18 = arith.constant 0.000000e+00 : f32
      %24 = vector.broadcast %cst_18 : f32 to vector<8x3xf32>
      %c0_19 = arith.constant 0 : index
      %c0_20 = arith.constant 0 : index
      %25 = vector.load %arg5[%c0_19, %c0_20] : memref<8x3xf32, #tpu.memory_space<vmem>>, vector<8x3xf32>
      tpu.vector_store %arg5[%c0_19, %c0_20], %24 {strides = array<i32>} : memref<8x3xf32, #tpu.memory_space<vmem>>, vector<8x3xf32>,
    } else {
    }
    %c0 = arith.constant 0 : index
    %c0_1 = arith.constant 0 : index
    %3 = vector.load %arg2[%c0, %c0_1] : memref<8x256xf32, #tpu.memory_space<vmem>>, vector<8x256xf32>
    %c0_2 = arith.constant 0 : index
    %c0_3 = arith.constant 0 : index
    %4 = vector.load %arg3[%c0_2, %c0_3] : memref<8x256xf32, #tpu.memory_space<vmem>>, vector<8x256xf32>
    %c0_4 = arith.constant 0 : index
    %c0_5 = arith.constant 0 : index
    %5 = vector.load %arg5[%c0_4, %c0_5] : memref<8x3xf32, #tpu.memory_space<vmem>>, vector<8x1xf32>
    %6 = arith.mulf %3, %4 : vector<8x256xf32>
    %cst = arith.constant dense<0.000000e+00> : vector<8xf32>
    %7 = vector.multi_reduction <add>, %6, %cst [1] : vector<8x256xf32> to vector<8xf32>
    %8 = vector.shape_cast %7 : vector<8xf32> to vector<8x1xf32>
    %9 = arith.addf %5, %8 : vector<8x1xf32>
    %c0_6 = arith.constant 0 : index
    %c0_7 = arith.constant 0 : index
    %10 = vector.load %arg5[%c0_6, %c0_7] : memref<8x3xf32, #tpu.memory_space<vmem>>, vector<8x1xf32>
    tpu.vector_store %arg5[%c0_6, %c0_7], %9 {strides = array<i32>} : memref<8x3xf32, #tpu.memory_space<vmem>>, vector<8x1xf32>,
    %c0_8 = arith.constant 0 : index
    %c1 = arith.constant 1 : index
    %11 = vector.load %arg5[%c0_8, %c1] : memref<8x3xf32, #tpu.memory_space<vmem>>, vector<8x1xf32>
    %cst_9 = arith.constant dense<0.000000e+00> : vector<8xf32>
    %12 = vector.multi_reduction <add>, %3, %cst_9 [1] : vector<8x256xf32> to vector<8xf32>
    %13 = vector.shape_cast %12 : vector<8xf32> to vector<8x1xf32>
    %14 = arith.addf %11, %13 : vector<8x1xf32>
    %c0_10 = arith.constant 0 : index
    %c1_11 = arith.constant 1 : index
    %15 = vector.load %arg5[%c0_10, %c1_11] : memref<8x3xf32, #tpu.memory_space<vmem>>, vector<8x1xf32>
    tpu.vector_store %arg5[%c0_10, %c1_11], %14 {strides = array<i32>} : memref<8x3xf32, #tpu.memory_space<vmem>>, vector<8x1xf32>,
    %c0_12 = arith.constant 0 : index
    %c2 = arith.constant 2 : index
    %16 = vector.load %arg5[%c0_12, %c2] : memref<8x3xf32, #tpu.memory_space<vmem>>, vector<8x1xf32>
    %cst_13 = arith.constant dense<0.000000e+00> : vector<8xf32>
    %17 = vector.multi_reduction <add>, %4, %cst_13 [1] : vector<8x256xf32> to vector<8xf32>
    %18 = vector.shape_cast %17 : vector<8xf32> to vector<8x1xf32>
    %19 = arith.addf %16, %18 : vector<8x1xf32>
    %c0_14 = arith.constant 0 : index
    %c2_15 = arith.constant 2 : index
    %20 = vector.load %arg5[%c0_14, %c2_15] : memref<8x3xf32, #tpu.memory_space<vmem>>, vector<8x1xf32>
    tpu.vector_store %arg5[%c0_14, %c2_15], %19 {strides = array<i32>} : memref<8x3xf32, #tpu.memory_space<vmem>>, vector<8x1xf32>,
    %c0_i32_16 = arith.constant 0 : i32
    %21 = arith.cmpi eq, %arg1, %c0_i32_16 : i32
    %22 = arith.extui %21 : i1 to i32
    %c0_i32_17 = arith.constant 0 : i32
    %23 = arith.cmpi ne, %22, %c0_i32_17 : i32
    scf.if %23 {
      %c0_18 = arith.constant 0 : index
      %c0_19 = arith.constant 0 : index
      %24 = vector.load %arg5[%c0_18, %c0_19] : memref<8x3xf32, #tpu.memory_space<vmem>>, vector<8x3xf32>
      %c0_20 = arith.constant 0 : index
      %c0_21 = arith.constant 0 : index
      %25 = vector.load %arg4[%c0_20, %c0_21] : memref<8x3xf32, #tpu.memory_space<vmem>>, vector<8x3xf32>
      tpu.vector_store %arg4[%c0_20, %c0_21], %24 {strides = array<i32>} : memref<8x3xf32, #tpu.memory_space<vmem>>, vector<8x3xf32>,
    } else {
    }
    return
  }
  func.func @transform_0(%arg0: i32, %arg1: i32) -> (i32, i32) {
    %c0_i32 = arith.constant 0 : i32
    return %arg0, %arg1 : i32, i32
  }
  func.func @transform_1(%arg0: i32, %arg1: i32) -> (i32, i32) {
    %c0_i32 = arith.constant 0 : i32
    return %arg0, %arg1 : i32, i32
  }
  func.func @transform_2(%arg0: i32, %arg1: i32) -> (i32, i32) {
    %c0_i32 = arith.constant 0 : i32
    %c0_i32_0 = arith.constant 0 : i32
    return %arg0, %c0_i32 : i32, i32
  }
}

</mosaic_0001>

<llo_original>
// kernel: multiclass_dice_loss.1
$region0: #{multiclass_dice_loss.1}
  #allocation0 [shape = 'u32[]', space=smem, size = 0x4, offset = 0x4, fixed_abs, tag = 'smem constant byte address 0x4 - core index']
  #allocation1 [shape = 'u32[72,128]{1,0:T(1,128)}', space=vmem, size = 0x9000, scoped, tag = 'internal scratch']
  #allocation2 [shape = 'f32[8,3]{1,0:T(8,128)}', space=vmem, size = 0x1000, scoped, tag = 'scratch operand']
  %s0 = inlined_call_operand.vmem [shape: f32[8,256], index: 0, kind: input, shape index: {}]
  %s1 = inlined_call_operand.vmem [shape: f32[8,256], index: 1, kind: input, shape index: {}]
  %s2 = inlined_call_operand.vmem [shape: f32[8,3], index: 2, kind: output, shape index: {}]
  %s3 = sld [smem:[#allocation0]]
  $region26: #{multiclass_dice_loss.1} parent=0
    _
  %s5 = ssub.s32 1, %s3
  %s6 = scalar_select 0, %s5, %s3
  // Predicated region
  $region2: #{multiclass_dice_loss.1} parent=0 // pred_check
    _
  $region3: #{multiclass_dice_loss.1} parent=0 // pred_check_branch
    %8 = sbr.rel (0) target = $region5
  $region4: #{multiclass_dice_loss.1} parent=0 // pred_region
    _
  $region5: #{multiclass_dice_loss.1} parent=0 // pred_fallthru
    _
  // Predicated region
  $region6: #{multiclass_dice_loss.1} parent=0 // pred_check
    _
  $region7: #{multiclass_dice_loss.1} parent=0 // pred_check_branch
    %10 = sbr.rel (0) target = $region9
  $region8: #{multiclass_dice_loss.1} parent=0 // pred_region
    _
  $region9: #{multiclass_dice_loss.1} parent=0 // pred_fallthru
    _
  %p11 = scmp.eq.s32.totalorder 0, 0
  // Predicated region
  $region10: #{multiclass_dice_loss.1} parent=0 // pred_check
    %p12 = pneg %p11
  $region11: #{multiclass_dice_loss.1} parent=0 // pred_check_branch
    %14 = sbr.rel (%p12) target = $region13
  $region12: #{multiclass_dice_loss.1} parent=0 // pred_region
    %vm15 = vcmask 23552
    %16 = vst.msk [vmem:[#allocation2] sm:$0xff] %vm15, 0.0
  $region13: #{multiclass_dice_loss.1} parent=0 // pred_fallthru
    _
  %v17 = vld [vmem:[%s0] sm:$0xff]
  %v18 = vld [vmem:[%s0 + $0x8] sm:$0xff]
  %v19 = vld [vmem:[%s1] sm:$0xff]
  %v20 = vld [vmem:[%s1 + $0x8] sm:$0xff]
  %v21 = vld [vmem:[#allocation2] sm:$0xff]
  %v22 = vmul.f32 %v17, %v19
  %v23 = vmul.f32 %v18, %v20
  %v24 = vadd.f32 %v22, %v23
  %25 = vadd.xlane.f32.xlu0 %v24
  %v26 = vpop.xlane.xlu0 %25
  %v27 = vadd.f32 %v21, %v26
  %vm28 = vcmask 7168
  %29 = vst.msk [vmem:[#allocation2] sm:$0xff] %vm28, %v27
  %v30 = vld [vmem:[#allocation2] sm:$0xff]
  %v31 = vadd.f32 %v17, %v18
  %32 = vadd.xlane.f32.xlu0 %v31
  %v33 = vpop.xlane.xlu0 %32
  %v34 = vadd.f32 %v30, %v33
  %vm35 = vcmask 15368
  %36 = vst.msk [vmem:[#allocation2] sm:$0xff] %vm35, %v34
  %v37 = vld [vmem:[#allocation2] sm:$0xff]
  %v38 = vadd.f32 %v19, %v20
  %39 = vadd.xlane.f32.xlu0 %v38
  %v40 = vpop.xlane.xlu0 %39
  %v41 = vadd.f32 %v37, %v40
  %vm42 = vcmask 23568
  %43 = vst.msk [vmem:[#allocation2] sm:$0xff] %vm42, %v41
  // Predicated region
  $region14: #{multiclass_dice_loss.1} parent=0 // pred_check
    %p44 = pneg %p11
  $region15: #{multiclass_dice_loss.1} parent=0 // pred_check_branch
    %46 = sbr.rel (%p44) target = $region17
  $region16: #{multiclass_dice_loss.1} parent=0 // pred_region
    %v47 = vld [vmem:[#allocation2] sm:$0xff]
    %vm48 = vcmask 23552
    %49 = vst.msk [vmem:[%s2] sm:$0xff] %vm48, %v47
  $region17: #{multiclass_dice_loss.1} parent=0 // pred_fallthru
    _
  // Predicated region
  $region18: #{multiclass_dice_loss.1} parent=0 // pred_check
    _
  $region19: #{multiclass_dice_loss.1} parent=0 // pred_check_branch
    %51 = sbr.rel (0) target = $region21
  $region20: #{multiclass_dice_loss.1} parent=0 // pred_region
    _
  $region21: #{multiclass_dice_loss.1} parent=0 // pred_fallthru
    _
  // Predicated region
  $region22: #{multiclass_dice_loss.1} parent=0 // pred_check
    _
  $region23: #{multiclass_dice_loss.1} parent=0 // pred_check_branch
    %53 = sbr.rel (0) target = $region25
  $region24: #{multiclass_dice_loss.1} parent=0 // pred_region
    _
  $region25: #{multiclass_dice_loss.1} parent=0 // pred_fallthru
    _

</llo_original>
